<compile_context>
chip_gen: v7x
topology: tpu7x:2x2x1
jax: 0.10.0
libtpu: 0.0.40
codegen_flags: <defaults>
</compile_context>

<pallas_src>
import math

import jax
import jax.numpy as jnp
from jax import lax
from jax.experimental import pallas as pl
from jax.experimental.pallas import tpu as pltpu


def _pick_tile(dim, cap, step):
    """Largest tile <= cap that divides dim and is a multiple of step; else whole dim."""
    if dim <= cap:
        return dim
    t = (cap // step) * step
    while t >= step:
        if dim % t == 0:
            return t
        t -= step
    return dim  # full dim is always a legal block


def _vmem_limit(nbytes):
    """Explicit scoped-VMEM request: 2x footprint + headroom, clamped under v7x physical."""
    return int(min(max(2 * nbytes + (2 << 20), 16 << 20), 60 << 20))


# ------------------------- QKV projection (tiled matmul) -------------------------
def _qkv_kernel(x_ref, w_ref, b_ref, o_ref, acc_ref):
    # x_ref: (tm, tk) f32, w_ref: (tk, tn) bf16 (pre-transposed, pre-scaled),
    # b_ref: (1, tn) f32, o_ref: (tm, tn) bf16, acc_ref: (tm, tn) f32 scratch.
    @pl.when(pl.program_id(2) == 0)
    def _():
        acc_ref[...] = jnp.zeros_like(acc_ref)

    acc_ref[...] += jnp.dot(
        x_ref[...].astype(jnp.bfloat16),
        w_ref[...],
        preferred_element_type=jnp.float32,
    )

    @pl.when(pl.program_id(2) == pl.num_programs(2) - 1)
    def _():
        o_ref[...] = (acc_ref[...] + b_ref[...]).astype(o_ref.dtype)


def _qkv_project(x2d, w_t, b_row):
    M, C = x2d.shape
    C3 = w_t.shape[1]
    tm = _pick_tile(M, 512, 8)
    tn = _pick_tile(C3, 512, 128)
    tk = _pick_tile(C, 256, 128)
    grid = (M // tm, C3 // tn, C // tk)
    vmem = 2 * (tm * tk * 4 + tk * tn * 2 + tn * 4 + tm * tn * 2) + tm * tn * 4
    return pl.pallas_call(
        _qkv_kernel,
        out_shape=jax.ShapeDtypeStruct((M, C3), jnp.bfloat16),
        grid_spec=pltpu.PrefetchScalarGridSpec(
            num_scalar_prefetch=0,
            grid=grid,
            in_specs=[
                pl.BlockSpec((tm, tk), lambda i, j, k: (i, k)),
                pl.BlockSpec((tk, tn), lambda i, j, k: (k, j)),
                pl.BlockSpec((1, tn), lambda i, j, k: (0, j)),
            ],
            out_specs=pl.BlockSpec((tm, tn), lambda i, j, k: (i, j)),
            scratch_shapes=[pltpu.VMEM((tm, tn), jnp.float32)],
        ),
        compiler_params=pltpu.CompilerParams(
            dimension_semantics=("parallel", "parallel", "arbitrary"),
            vmem_limit_bytes=_vmem_limit(vmem),
        ),
    )(x2d, w_t, b_row)


# --------------------------- attention kernel ----------------------------
def _make_attn_kernel(n_head, hd, tq, tkv):
    def kernel(q_ref, k_ref, v_ref, o_ref):
        # q_ref: (tq, C) bf16, k_ref / v_ref: (T, C) bf16, o_ref: (tq, C) f32
        qi = pl.program_id(1)
        row_base = qi * tq

        # Causal trip counts: kv blocks [0, n_full) are fully un-masked,
        # [n_full, n_kv) straddle the diagonal, blocks >= n_kv are fully
        # masked and never loaded/computed.
        n_kv = (row_base + tq + tkv - 1) // tkv
        n_full = (row_base + 1) // tkv

        # Mask geometry hoisted out of the head loop (reused per diagonal block).
        row = row_base + lax.broadcasted_iota(jnp.int32, (tq, tkv), 0)
        col0 = lax.broadcasted_iota(jnp.int32, (tq, tkv), 1)

        for h in range(n_head):  # static unroll over heads
            lo, hi = h * hd, (h + 1) * hd
            q_h = q_ref[:, lo:hi]  # (tq, hd) bf16, scale already folded into W

            def scores(kv_start, _q=q_h, _lo=lo, _hi=hi):
                k_blk = k_ref[pl.ds(kv_start, tkv), _lo:_hi]  # (tkv, hd) bf16
                # q @ k^T without materializing k^T (contract last dims).
                return lax.dot_general(
                    _q,
                    k_blk,
                    dimension_numbers=(((1,), (1,)), ((), ())),
                    preferred_element_type=jnp.float32,
                )

            def pv(p, kv_start, _lo=lo, _hi=hi):
                v_blk = v_ref[pl.ds(kv_start, tkv), _lo:_hi]  # (tkv, hd) bf16
                return jnp.dot(
                    p.astype(jnp.bfloat16), v_blk, preferred_element_type=jnp.float32
                )

            def body_unmasked(kvi, acc):
                kv_start = pl.multiple_of(kvi * tkv, tkv)
                p = jnp.maximum(scores(kv_start), 0.0)  # ReLU only, mask-free
                return acc + pv(p, kv_start)

            def body_masked(kvi, acc):
                kv_start = pl.multiple_of(kvi * tkv, tkv)
                s = scores(kv_start)
                causal = row >= (kv_start + col0)
                # relu(masked_fill(-inf)) == where(causal, relu(s), 0)
                p = jnp.where(causal, jnp.maximum(s, 0.0), 0.0)
                return acc + pv(p, kv_start)

            acc = jnp.zeros((tq, hd), jnp.float32)
            acc = lax.fori_loop(0, n_full, body_unmasked, acc)
            acc = lax.fori_loop(n_full, n_kv, body_masked, acc)

            # Write this head's static column slice of the lane-dense output block.
            o_ref[:, lo:hi] = acc.astype(o_ref.dtype)

    return kernel


def _attention(qkv, B, T, C, n_head):
    # qkv: (B, T, 3C) bf16; q = [:, :, 0:C], k = [:, :, C:2C], v = [:, :, 2C:3C]
    hd = C // n_head
    tq = _pick_tile(T, 256, 8)
    tkv = _pick_tile(T, 256, 128)
    nq = T // tq
    kernel = _make_attn_kernel(n_head, hd, tq, tkv)
    # footprint: q (x2 buf, bf16) + k/v (x2 buf each, bf16, full T) + out (x2 buf, f32)
    vmem = 2 * (tq * C * 2) + 2 * 2 * (T * C * 2) + 2 * (tq * C * 4)
    return pl.pallas_call(
        kernel,
        out_shape=jax.ShapeDtypeStruct((B, T, C), jnp.float32),
        grid_spec=pltpu.PrefetchScalarGridSpec(
            num_scalar_prefetch=0,
            grid=(B, nq),
            in_specs=[
                pl.BlockSpec((None, tq, C), lambda b, i: (b, i, 0)),  # q rows
                pl.BlockSpec((None, T, C), lambda b, i: (b, 0, 1)),   # k (all rows)
                pl.BlockSpec((None, T, C), lambda b, i: (b, 0, 2)),   # v (all rows)
            ],
            out_specs=pl.BlockSpec((None, tq, C), lambda b, i: (b, i, 0)),
        ),
        compiler_params=pltpu.CompilerParams(
            dimension_semantics=("parallel", "parallel"),
            vmem_limit_bytes=_vmem_limit(vmem),
        ),
    )(qkv, qkv, qkv)


# ------------------------------ full forward ------------------------------
def relu_self_attention(x, c_attn_weight, c_attn_bias, bias, n_head, n_embd):
    """Pallas implementation of module_fn (forward only)."""
    B, T, C = x.shape
    assert C == n_embd and C % n_head == 0
    hd = C // n_head
    scale = 1.0 / math.sqrt(hd)

    # One-time weight transform: transpose to (C, 3C) so the kernel contracts
    # A@B style (no per-tile weight transpose on the MXU feed path), fold the
    # 1/sqrt(hd) score scale into the q-third of W and b, cast W to bf16.
    col_scale = jnp.concatenate(
        [jnp.full((C,), scale, jnp.float32), jnp.ones((2 * C,), jnp.float32)]
    )
    w_t = (c_attn_weight.T * col_scale[None, :]).astype(jnp.bfloat16)  # (C, 3C)
    b_row = (c_attn_bias * col_scale).reshape(1, 3 * C).astype(jnp.float32)

    # QKV projection -> bf16 (B*T, 3C); attention consumes bf16 anyway.
    qkv = _qkv_project(x.reshape(B * T, C), w_t, b_row)
    qkv = qkv.reshape(B, T, 3 * C)  # pure view, no data movement

    # TODO(synk): `bias` is assumed to be the module's standard lower-triangular
    # causal mask; it is regenerated in-kernel via iota instead of being DMA'd.
    return _attention(qkv, B, T, C, n_head)  # (B, T, C) f32, final layout


# --------------------------- pure-JAX reference ---------------------------
def _reference(x, c_attn_weight, c_attn_bias, bias, n_head, n_embd):
    B, T, C = x.shape
    hd = C // n_head
    qkv = x @ c_attn_weight.T + c_attn_bias
    q, k, v = jnp.split(qkv, 3, axis=2)
    q = q.reshape(B, T, n_head, hd).transpose(0, 2, 1, 3)
    k = k.reshape(B, T, n_head, hd).transpose(0, 2, 1, 3)
    v = v.reshape(B, T, n_head, hd).transpose(0, 2, 1, 3)
    att = (q @ jnp.swapaxes(k, -2, -1)) * (1.0 / math.sqrt(hd))
    att = jnp.where(bias[:, :, :T, :T] == 0, -jnp.inf, att)
    att = jnp.maximum(att, 0.0)
    y = att @ v
    return y.transpose(0, 2, 1, 3).reshape(B, T, C)


if __name__ == "__main__":
    # Small shapes consistent with the module (n_embd divisible by n_head).
    B, T = 2, 64
    n_embd, n_head = 128, 4
    max_seqlen = 128

    key = jax.random.PRNGKey(0)
    kx, kw, kb = jax.random.split(key, 3)

    x = jax.random.normal(kx, (B, T, n_embd), dtype=jnp.float32)
    # nn.Linear(n_embd, 3*n_embd): weight (3*n_embd, n_embd), bias (3*n_embd,)
    bound = 1.0 / math.sqrt(n_embd)
    c_attn_weight = jax.random.uniform(
        kw, (3 * n_embd, n_embd), jnp.float32, -bound, bound
    )
    c_attn_bias = jax.random.uniform(kb, (3 * n_embd,), jnp.float32, -bound, bound)
    # causal mask buffer: tril(ones(max_seqlen, max_seqlen)).view(1,1,ms,ms)
    causal = jnp.tril(jnp.ones((max_seqlen, max_seqlen), jnp.float32))
    causal = causal.reshape(1, 1, max_seqlen, max_seqlen)

    y = relu_self_attention(x, c_attn_weight, c_attn_bias, causal, n_head, n_embd)
    y = jax.block_until_ready(y)

    y_ref = _reference(x, c_attn_weight, c_attn_bias, causal, n_head, n_embd)
    assert y.shape == (B, T, n_embd)
    # bf16 MXU path: check against the f32 reference with a bf16-appropriate bound.
    max_err = float(jnp.max(jnp.abs(y - y_ref)))
    ref_scale = float(jnp.max(jnp.abs(y_ref)))
    assert max_err <= 0.03 * ref_scale + 0.02, (max_err, ref_scale)

    print("KERNEL_OK")
</pallas_src>

<mosaic_0001>
module attributes {stable_mosaic.version = 11 : i64} {
  func.func @_qkv_kernel(%arg0: i32, %arg1: i32, %arg2: i32, %arg3: memref<128x128xf32, #tpu.memory_space<vmem>>, %arg4: memref<128x384xbf16, #tpu.memory_space<vmem>>, %arg5: memref<1x384xf32, #tpu.memory_space<vmem>>, %arg6: memref<128x384xbf16, #tpu.memory_space<vmem>>, %arg7: memref<128x384xf32, #tpu.memory_space<vmem>>) attributes {dimension_semantics = [#tpu.dimension_semantics<parallel>, #tpu.dimension_semantics<parallel>, #tpu.dimension_semantics<arbitrary>], iteration_bounds = array<i64: 1, 1, 1>, scalar_prefetch = 0 : i64, scratch_operands = 1 : i64, tpu.core_type = #tpu.core_type<tc>, window_params = [{transform_indices = @transform_0, window_bounds = array<i64: 128, 128>}, {transform_indices = @transform_1, window_bounds = array<i64: 128, 384>}, {transform_indices = @transform_2, window_bounds = array<i64: 1, 384>}, {transform_indices = @transform_3, window_bounds = array<i64: 128, 384>}]} {
    %c0_i32 = arith.constant 0 : i32
    %0 = arith.cmpi eq, %arg2, %c0_i32 : i32
    %1 = arith.extui %0 : i1 to i32
    %c0_i32_0 = arith.constant 0 : i32
    %2 = arith.cmpi ne, %1, %c0_i32_0 : i32
    scf.if %2 {
      %cst_10 = arith.constant 0.000000e+00 : f32
      %13 = vector.broadcast %cst_10 : f32 to vector<128x384xf32>
      %c0_11 = arith.constant 0 : index
      %c0_12 = arith.constant 0 : index
      %14 = vector.load %arg7[%c0_11, %c0_12] : memref<128x384xf32, #tpu.memory_space<vmem>>, vector<128x384xf32>
      tpu.vector_store %arg7[%c0_11, %c0_12], %13 {strides = array<i32>} : memref<128x384xf32, #tpu.memory_space<vmem>>, vector<128x384xf32>,
    } else {
    }
    %c0 = arith.constant 0 : index
    %c0_1 = arith.constant 0 : index
    %3 = vector.load %arg7[%c0, %c0_1] : memref<128x384xf32, #tpu.memory_space<vmem>>, vector<128x384xf32>
    %c0_2 = arith.constant 0 : index
    %c0_3 = arith.constant 0 : index
    %4 = vector.load %arg3[%c0_2, %c0_3] : memref<128x128xf32, #tpu.memory_space<vmem>>, vector<128x128xf32>
    %5 = arith.truncf %4 : vector<128x128xf32> to vector<128x128xbf16>
    %c0_4 = arith.constant 0 : index
    %c0_5 = arith.constant 0 : index
    %6 = vector.load %arg4[%c0_4, %c0_5] : memref<128x384xbf16, #tpu.memory_space<vmem>>, vector<128x384xbf16>
    %cst = arith.constant dense<0.000000e+00> : vector<128x384xf32>
    %7 = tpu.matmul %5, %6, %cst {dimension_numbers = #tpu.dot_dimension_numbers<[1], [0], [0], [1], [0, 0, 1, 1], [], []>} : vector<128x128xbf16>, vector<128x384xbf16>, vector<128x384xf32> -> vector<128x384xf32>
    %8 = arith.addf %3, %7 : vector<128x384xf32>
    %c0_6 = arith.constant 0 : index
    %c0_7 = arith.constant 0 : index
    %9 = vector.load %arg7[%c0_6, %c0_7] : memref<128x384xf32, #tpu.memory_space<vmem>>, vector<128x384xf32>
    tpu.vector_store %arg7[%c0_6, %c0_7], %8 {strides = array<i32>} : memref<128x384xf32, #tpu.memory_space<vmem>>, vector<128x384xf32>,
    %c0_i32_8 = arith.constant 0 : i32
    %10 = arith.cmpi eq, %arg2, %c0_i32_8 : i32
    %11 = arith.extui %10 : i1 to i32
    %c0_i32_9 = arith.constant 0 : i32
    %12 = arith.cmpi ne, %11, %c0_i32_9 : i32
    scf.if %12 {
      %c0_10 = arith.constant 0 : index
      %c0_11 = arith.constant 0 : index
      %13 = vector.load %arg7[%c0_10, %c0_11] : memref<128x384xf32, #tpu.memory_space<vmem>>, vector<128x384xf32>
      %c0_12 = arith.constant 0 : index
      %c0_13 = arith.constant 0 : index
      %14 = vector.load %arg5[%c0_12, %c0_13] : memref<1x384xf32, #tpu.memory_space<vmem>>, vector<1x384xf32>
      %15 = vector.broadcast %14 : vector<1x384xf32> to vector<128x384xf32>
      %16 = arith.addf %13, %15 : vector<128x384xf32>
      %17 = arith.truncf %16 : vector<128x384xf32> to vector<128x384xbf16>
      %c0_14 = arith.constant 0 : index
      %c0_15 = arith.constant 0 : index
      %18 = vector.load %arg6[%c0_14, %c0_15] : memref<128x384xbf16, #tpu.memory_space<vmem>>, vector<128x384xbf16>
      tpu.vector_store %arg6[%c0_14, %c0_15], %17 {strides = array<i32>} : memref<128x384xbf16, #tpu.memory_space<vmem>>, vector<128x384xbf16>,
    } else {
    }
    return
  }
  func.func @transform_0(%arg0: i32, %arg1: i32, %arg2: i32) -> (i32, i32) {
    %c0_i32 = arith.constant 0 : i32
    return %arg0, %arg2 : i32, i32
  }
  func.func @transform_1(%arg0: i32, %arg1: i32, %arg2: i32) -> (i32, i32) {
    %c0_i32 = arith.constant 0 : i32
    return %arg2, %arg1 : i32, i32
  }
  func.func @transform_2(%arg0: i32, %arg1: i32, %arg2: i32) -> (i32, i32) {
    %c0_i32 = arith.constant 0 : i32
    %c0_i32_0 = arith.constant 0 : i32
    return %c0_i32, %arg1 : i32, i32
  }
  func.func @transform_3(%arg0: i32, %arg1: i32, %arg2: i32) -> (i32, i32) {
    %c0_i32 = arith.constant 0 : i32
    return %arg0, %arg1 : i32, i32
  }
}

</mosaic_0001>

<llo_original>
// kernel: tpu_custom_call.1
$region0: #{tpu_custom_call.1}
  #allocation0 [shape = 'u32[]', space=smem, size = 0x4, offset = 0x4, fixed_abs, tag = 'smem constant byte address 0x4 - core index']
  #allocation1 [shape = 'u32[144,128]{1,0:T(1,128)}', space=vmem, size = 0x12000, scoped, tag = 'internal scratch']
  #allocation2 [shape = 'f32[128,384]{1,0:T(8,128)}', space=vmem, size = 0x30000, scoped, tag = 'scratch operand']
  %s0 = inlined_call_operand.hbm [shape: f32[128,128], index: 0, kind: input, shape index: {}]
  %s1 = inlined_call_operand.hbm [shape: bf16[128,384], index: 1, kind: input, shape index: {}]
  %s2 = inlined_call_operand.vmem [shape: f32[1,384], index: 2, kind: input, shape index: {}]
  %s3 = inlined_call_operand.hbm [shape: bf16[128,384], index: 3, kind: output, shape index: {}]
  %s4 = sld [smem:[#allocation0]]
  $region38: #{tpu_custom_call.1} parent=0
    _
  %s6 = ssub.s32 1, %s4
  %s7 = scalar_select 0, %s6, %s4
  $region1: #{tpu_custom_call.1} parent=0
    #allocation3 [shape = 'u8[65536]{0}', space=vmem, size = 0x10000, scoped, tag = 'input window, operand 0, single buffered']
    #allocation4 [shape = 's32[1]{0}', space=sflag, size = 0x4, scoped, tag = 'scoped memory for tpu_custom_call.1']
    #allocation5 [shape = 's32[1]{0}', space=sflag, size = 0x4, scoped, tag = 'scoped memory for tpu_custom_call.1']
    #allocation6 [shape = 'u8[98304]{0}', space=vmem, size = 0x18000, scoped, tag = 'input window, operand 1, single buffered']
    #allocation7 [shape = 's32[1]{0}', space=sflag, size = 0x4, scoped, tag = 'scoped memory for tpu_custom_call.1']
    #allocation8 [shape = 'u8[98304]{0}', space=vmem, size = 0x18000, scoped, tag = 'output window, operand 0, single buffered']
    %8 = vsyncpa [#allocation4], 0
    %9 = vsyncpa [#allocation7], 0
    %10 = vsyncpa [#allocation5], 0
    // Predicated region
    $region2: #{tpu_custom_call.1} parent=1 // pred_check
      _
    $region3: #{tpu_custom_call.1} parent=1 // pred_check_branch
      %12 = sbr.rel (0) target = $region5
    $region4: #{tpu_custom_call.1} parent=1 // pred_region
      %s14 = ssub.s32 2048, 2048
      %15 = vsyncadd [#allocation4], %s14
      %s16 = sshll.u32 [#allocation3], 4
      %s17 = int_to_ptr.vmem [resolvable:$true] %s16
      %22 = dma.hbm_to_vmem [thread:$0]  %s0, 2048, %s17, [#allocation4], 128, 128, 8
    $region5: #{tpu_custom_call.1} parent=1 // pred_fallthru
      _
    // Predicated region
    $region6: #{tpu_custom_call.1} parent=1 // pred_check
      _
    $region7: #{tpu_custom_call.1} parent=1 // pred_check_branch
      %24 = sbr.rel (0) target = $region9
    $region8: #{tpu_custom_call.1} parent=1 // pred_region
      %s26 = ssub.s32 3072, 3072
      %27 = vsyncadd [#allocation7], %s26
      %s28 = sshll.u32 [#allocation6], 4
      %s29 = int_to_ptr.vmem [resolvable:$true] %s28
      %34 = dma.hbm_to_vmem [thread:$0]  %s1, 3072, %s29, [#allocation7], 192, 192, 12
    $region9: #{tpu_custom_call.1} parent=1 // pred_fallthru
      _
    // Predicated region
    $region10: #{tpu_custom_call.1} parent=1 // pred_check
      _
    $region11: #{tpu_custom_call.1} parent=1 // pred_check_branch
      %36 = sbr.rel (0) target = $region13
    $region12: #{tpu_custom_call.1} parent=1 // pred_region
      _
    $region13: #{tpu_custom_call.1} parent=1 // pred_fallthru
      _
    // Predicated region
    $region14: #{tpu_custom_call.1} parent=1 // pred_check
      _
    $region15: #{tpu_custom_call.1} parent=1 // pred_check_branch
      %38 = sbr.rel (0) target = $region17
    $region16: #{tpu_custom_call.1} parent=1 // pred_region
      %39 = dma.done [#allocation4], 2048
    $region17: #{tpu_custom_call.1} parent=1 // pred_fallthru
      _
    // Predicated region
    $region18: #{tpu_custom_call.1} parent=1 // pred_check
      _
    $region19: #{tpu_custom_call.1} parent=1 // pred_check_branch
      %41 = sbr.rel (0) target = $region21
    $region20: #{tpu_custom_call.1} parent=1 // pred_region
      %42 = dma.done [#allocation7], 3072
    $region21: #{tpu_custom_call.1} parent=1 // pred_fallthru
      _
    %p44 = scmp.eq.s32.totalorder 0, 0
    // Predicated region
    $region22: #{tpu_custom_call.1} parent=1 // pred_check
      %p45 = pneg %p44
    $region23: #{tpu_custom_call.1} parent=1 // pred_check_branch
      %47 = sbr.rel (%p45) target = $region25
    $region24: #{tpu_custom_call.1} parent=1 // pred_region
      %48 = vst [vmem:[#allocation2] sm:$0xff] 0.0
      %49 = vst [vmem:[#allocation2 + $0x8] sm:$0xff] 0.0
      %50 = vst [vmem:[#allocation2 + $0x10] sm:$0xff] 0.0
      %51 = vst [vmem:[#allocation2 + $0x18] sm:$0xff] 0.0
      %52 = vst [vmem:[#allocation2 + $0x20] sm:$0xff] 0.0
      %53 = vst [vmem:[#allocation2 + $0x28] sm:$0xff] 0.0
      %54 = vst [vmem:[#allocation2 + $0x30] sm:$0xff] 0.0
      %55 = vst [vmem:[#allocation2 + $0x38] sm:$0xff] 0.0
      %56 = vst [vmem:[#allocation2 + $0x40] sm:$0xff] 0.0
      %57 = vst [vmem:[#allocation2 + $0x48] sm:$0xff] 0.0
      %58 = vst [vmem:[#allocation2 + $0x50] sm:$0xff] 0.0
      %59 = vst [vmem:[#allocation2 + $0x58] sm:$0xff] 0.0
      %60 = vst [vmem:[#allocation2 + $0x60] sm:$0xff] 0.0
      %61 = vst [vmem:[#allocation2 + $0x68] sm:$0xff] 0.0
      %62 = vst [vmem:[#allocation2 + $0x70] sm:$0xff] 0.0
      %63 = vst [vmem:[#allocation2 + $0x78] sm:$0xff] 0.0
      %64 = vst [vmem:[#allocation2 + $0x80] sm:$0xff] 0.0
      %65 = vst [vmem:[#allocation2 + $0x88] sm:$0xff] 0.0
      %66 = vst [vmem:[#allocation2 + $0x90] sm:$0xff] 0.0
      %67 = vst [vmem:[#allocation2 + $0x98] sm:$0xff] 0.0
      %68 = vst [vmem:[#allocation2 + $0xa0] sm:$0xff] 0.0
      %69 = vst [vmem:[#allocation2 + $0xa8] sm:$0xff] 0.0
      %70 = vst [vmem:[#allocation2 + $0xb0] sm:$0xff] 0.0
      %71 = vst [vmem:[#allocation2 + $0xb8] sm:$0xff] 0.0
      %72 = vst [vmem:[#allocation2 + $0xc0] sm:$0xff] 0.0
      %73 = vst [vmem:[#allocation2 + $0xc8] sm:$0xff] 0.0
      %74 = vst [vmem:[#allocation2 + $0xd0] sm:$0xff] 0.0
      %75 = vst [vmem:[#allocation2 + $0xd8] sm:$0xff] 0.0
      %76 = vst [vmem:[#allocation2 + $0xe0] sm:$0xff] 0.0
      %77 = vst [vmem:[#allocation2 + $0xe8] sm:$0xff] 0.0
      %78 = vst [vmem:[#allocation2 + $0xf0] sm:$0xff] 0.0
      %79 = vst [vmem:[#allocation2 + $0xf8] sm:$0xff] 0.0
      %80 = vst [vmem:[#allocation2 + $0x100] sm:$0xff] 0.0
      %81 = vst [vmem:[#allocation2 + $0x108] sm:$0xff] 0.0
      %82 = vst [vmem:[#allocation2 + $0x110] sm:$0xff] 0.0
      %83 = vst [vmem:[#allocation2 + $0x118] sm:$0xff] 0.0
      %84 = vst [vmem:[#allocation2 + $0x120] sm:$0xff] 0.0
      %85 = vst [vmem:[#allocation2 + $0x128] sm:$0xff] 0.0
      %86 = vst [vmem:[#allocation2 + $0x130] sm:$0xff] 0.0
      %87 = vst [vmem:[#allocation2 + $0x138] sm:$0xff] 0.0
      %88 = vst [vmem:[#allocation2 + $0x140] sm:$0xff] 0.0
      %89 = vst [vmem:[#allocation2 + $0x148] sm:$0xff] 0.0
      %90 = vst [vmem:[#allocation2 + $0x150] sm:$0xff] 0.0
      %91 = vst [vmem:[#allocation2 + $0x158] sm:$0xff] 0.0
      %92 = vst [vmem:[#allocation2 + $0x160] sm:$0xff] 0.0
      %93 = vst [vmem:[#allocation2 + $0x168] sm:$0xff] 0.0
      %94 = vst [vmem:[#allocation2 + $0x170] sm:$0xff] 0.0
      %95 = vst [vmem:[#allocation2 + $0x178] sm:$0xff] 0.0
    $region25: #{tpu_custom_call.1} parent=1 // pred_fallthru
      _
    %v96 = vld [vmem:[#allocation2] sm:$0xff]
    %v97 = vld [vmem:[#allocation2 + $0x8] sm:$0xff]
    %v98 = vld [vmem:[#allocation2 + $0x10] sm:$0xff]
    %v99 = vld [vmem:[#allocation2 + $0x18] sm:$0xff]
    %v100 = vld [vmem:[#allocation2 + $0x20] sm:$0xff]
    %v101 = vld [vmem:[#allocation2 + $0x28] sm:$0xff]
    %v102 = vld [vmem:[#allocation2 + $0x30] sm:$0xff]
    %v103 = vld [vmem:[#allocation2 + $0x38] sm:$0xff]
    %v104 = vld [vmem:[#allocation2 + $0x40] sm:$0xff]
    %v105 = vld [vmem:[#allocation2 + $0x48] sm:$0xff]
    %v106 = vld [vmem:[#allocation2 + $0x50] sm:$0xff]
    %v107 = vld [vmem:[#allocation2 + $0x58] sm:$0xff]
    %v108 = vld [vmem:[#allocation2 + $0x60] sm:$0xff]
    %v109 = vld [vmem:[#allocation2 + $0x68] sm:$0xff]
    %v110 = vld [vmem:[#allocation2 + $0x70] sm:$0xff]
    %v111 = vld [vmem:[#allocation2 + $0x78] sm:$0xff]
    %v112 = vld [vmem:[#allocation2 + $0x80] sm:$0xff]
    %v113 = vld [vmem:[#allocation2 + $0x88] sm:$0xff]
    %v114 = vld [vmem:[#allocation2 + $0x90] sm:$0xff]
    %v115 = vld [vmem:[#allocation2 + $0x98] sm:$0xff]
    %v116 = vld [vmem:[#allocation2 + $0xa0] sm:$0xff]
    %v117 = vld [vmem:[#allocation2 + $0xa8] sm:$0xff]
    %v118 = vld [vmem:[#allocation2 + $0xb0] sm:$0xff]
    %v119 = vld [vmem:[#allocation2 + $0xb8] sm:$0xff]
    %v120 = vld [vmem:[#allocation2 + $0xc0] sm:$0xff]
    %v121 = vld [vmem:[#allocation2 + $0xc8] sm:$0xff]
    %v122 = vld [vmem:[#allocation2 + $0xd0] sm:$0xff]
    %v123 = vld [vmem:[#allocation2 + $0xd8] sm:$0xff]
    %v124 = vld [vmem:[#allocation2 + $0xe0] sm:$0xff]
    %v125 = vld [vmem:[#allocation2 + $0xe8] sm:$0xff]
    %v126 = vld [vmem:[#allocation2 + $0xf0] sm:$0xff]
    %v127 = vld [vmem:[#allocation2 + $0xf8] sm:$0xff]
    %v128 = vld [vmem:[#allocation2 + $0x100] sm:$0xff]
    %v129 = vld [vmem:[#allocation2 + $0x108] sm:$0xff]
    %v130 = vld [vmem:[#allocation2 + $0x110] sm:$0xff]
    %v131 = vld [vmem:[#allocation2 + $0x118] sm:$0xff]
    %v132 = vld [vmem:[#allocation2 + $0x120] sm:$0xff]
    %v133 = vld [vmem:[#allocation2 + $0x128] sm:$0xff]
    %v134 = vld [vmem:[#allocation2 + $0x130] sm:$0xff]
    %v135 = vld [vmem:[#allocation2 + $0x138] sm:$0xff]
    %v136 = vld [vmem:[#allocation2 + $0x140] sm:$0xff]
    %v137 = vld [vmem:[#allocation2 + $0x148] sm:$0xff]
    %v138 = vld [vmem:[#allocation2 + $0x150] sm:$0xff]
    %v139 = vld [vmem:[#allocation2 + $0x158] sm:$0xff]
    %v140 = vld [vmem:[#allocation2 + $0x160] sm:$0xff]
    %v141 = vld [vmem:[#allocation2 + $0x168] sm:$0xff]
    %v142 = vld [vmem:[#allocation2 + $0x170] sm:$0xff]
    %v143 = vld [vmem:[#allocation2 + $0x178] sm:$0xff]
    %v144 = vld [vmem:[#allocation3] sm:$0xff]
    %v145 = vld [vmem:[#allocation3 + $0x8] sm:$0xff]
    %v146 = vld [vmem:[#allocation3 + $0x10] sm:$0xff]
    %v147 = vld [vmem:[#allocation3 + $0x18] sm:$0xff]
    %v148 = vld [vmem:[#allocation3 + $0x20] sm:$0xff]
    %v149 = vld [vmem:[#allocation3 + $0x28] sm:$0xff]
    %v150 = vld [vmem:[#allocation3 + $0x30] sm:$0xff]
    %v151 = vld [vmem:[#allocation3 + $0x38] sm:$0xff]
    %v152 = vld [vmem:[#allocation3 + $0x40] sm:$0xff]
    %v153 = vld [vmem:[#allocation3 + $0x48] sm:$0xff]
    %v154 = vld [vmem:[#allocation3 + $0x50] sm:$0xff]
    %v155 = vld [vmem:[#allocation3 + $0x58] sm:$0xff]
    %v156 = vld [vmem:[#allocation3 + $0x60] sm:$0xff]
    %v157 = vld [vmem:[#allocation3 + $0x68] sm:$0xff]
    %v158 = vld [vmem:[#allocation3 + $0x70] sm:$0xff]
    %v159 = vld [vmem:[#allocation3 + $0x78] sm:$0xff]
    %v160 = vpack.c.bf16 %v145, %v144
    %v161 = vpack.c.bf16 %v147, %v146
    %v162 = vpack.c.bf16 %v149, %v148
    %v163 = vpack.c.bf16 %v151, %v150
    %v164 = vpack.c.bf16 %v153, %v152
    %v165 = vpack.c.bf16 %v155, %v154
    %v166 = vpack.c.bf16 %v157, %v156
    %v167 = vpack.c.bf16 %v159, %v158
    %v168 = vld [vmem:[#allocation6] sm:$0xff]
    %v169 = vld [vmem:[#allocation6 + $0x8] sm:$0xf]
    %v170 = vld [vmem:[#allocation6 + $0xc] sm:$0xff]
    %v171 = vld [vmem:[#allocation6 + $0x14] sm:$0xf]
    %v172 = vld [vmem:[#allocation6 + $0x18] sm:$0xff]
    %v173 = vld [vmem:[#allocation6 + $0x20] sm:$0xf]
    %v174 = vld [vmem:[#allocation6 + $0x24] sm:$0xff]
    %v175 = vld [vmem:[#allocation6 + $0x2c] sm:$0xf]
    %v176 = vld [vmem:[#allocation6 + $0x30] sm:$0xff]
    %v177 = vld [vmem:[#allocation6 + $0x38] sm:$0xf]
    %v178 = vld [vmem:[#allocation6 + $0x3c] sm:$0xff]
    %v179 = vld [vmem:[#allocation6 + $0x44] sm:$0xf]
    %v180 = vld [vmem:[#allocation6 + $0x48] sm:$0xff]
    %v181 = vld [vmem:[#allocation6 + $0x50] sm:$0xf]
    %v182 = vld [vmem:[#allocation6 + $0x54] sm:$0xff]
    %v183 = vld [vmem:[#allocation6 + $0x5c] sm:$0xf]
    %v184 = vld [vmem:[#allocation6 + $0x60] sm:$0xff]
    %v185 = vld [vmem:[#allocation6 + $0x68] sm:$0xf]
    %v186 = vld [vmem:[#allocation6 + $0x6c] sm:$0xff]
    %v187 = vld [vmem:[#allocation6 + $0x74] sm:$0xf]
    %v188 = vld [vmem:[#allocation6 + $0x78] sm:$0xff]
    %v189 = vld [vmem:[#allocation6 + $0x80] sm:$0xf]
    %v190 = vld [vmem:[#allocation6 + $0x84] sm:$0xff]
    %v191 = vld [vmem:[#allocation6 + $0x8c] sm:$0xf]
    %v192 = vld [vmem:[#allocation6 + $0x90] sm:$0xff]
    %v193 = vld [vmem:[#allocation6 + $0x98] sm:$0xf]
    %v194 = vld [vmem:[#allocation6 + $0x9c] sm:$0xff]
    %v195 = vld [vmem:[#allocation6 + $0xa4] sm:$0xf]
    %v196 = vld [vmem:[#allocation6 + $0xa8] sm:$0xff]
    %v197 = vld [vmem:[#allocation6 + $0xb0] sm:$0xf]
    %v198 = vld [vmem:[#allocation6 + $0xb4] sm:$0xff]
    %v199 = vld [vmem:[#allocation6 + $0xbc] sm:$0xf]
    %v232 = vunpack.c.l.b16 %v168
    %v233 = vunpack.c.h.b16 %v168
    %v234 = vunpack.c.l.b16 %v169
    %v235 = vunpack.c.l.b16 %v170
    %v236 = vunpack.c.h.b16 %v170
    %v237 = vunpack.c.l.b16 %v171
    %v238 = vunpack.c.l.b16 %v172
    %v239 = vunpack.c.h.b16 %v172
    %v240 = vunpack.c.l.b16 %v173
    %v241 = vunpack.c.l.b16 %v174
    %v242 = vunpack.c.h.b16 %v174
    %v243 = vunpack.c.l.b16 %v175
    %v244 = vunpack.c.l.b16 %v176
    %v245 = vunpack.c.h.b16 %v176
    %v246 = vunpack.c.l.b16 %v177
    %v247 = vunpack.c.l.b16 %v178
    %v248 = vunpack.c.h.b16 %v178
    %v249 = vunpack.c.l.b16 %v179
    %v250 = vunpack.c.l.b16 %v180
    %v251 = vunpack.c.h.b16 %v180
    %v252 = vunpack.c.l.b16 %v181
    %v253 = vunpack.c.l.b16 %v182
    %v254 = vunpack.c.h.b16 %v182
    %v255 = vunpack.c.l.b16 %v183
    %v256 = vunpack.c.l.b16 %v184
    %v257 = vunpack.c.h.b16 %v184
    %v258 = vunpack.c.l.b16 %v185
    %v259 = vunpack.c.l.b16 %v186
    %v260 = vunpack.c.h.b16 %v186
    %v261 = vunpack.c.l.b16 %v187
    %v262 = vunpack.c.l.b16 %v188
    %v263 = vunpack.c.h.b16 %v188
    %v264 = vunpack.c.l.b16 %v189
    %v265 = vunpack.c.l.b16 %v190
    %v266 = vunpack.c.h.b16 %v190
    %v267 = vunpack.c.l.b16 %v191
    %v268 = vunpack.c.l.b16 %v192
    %v269 = vunpack.c.h.b16 %v192
    %v270 = vunpack.c.l.b16 %v193
    %v271 = vunpack.c.l.b16 %v194
    %v272 = vunpack.c.h.b16 %v194
    %v273 = vunpack.c.l.b16 %v195
    %v274 = vunpack.c.l.b16 %v196
    %v275 = vunpack.c.h.b16 %v196
    %v276 = vunpack.c.l.b16 %v197
    %v277 = vunpack.c.l.b16 %v198
    %v278 = vunpack.c.h.b16 %v198
    %v279 = vunpack.c.l.b16 %v199
    %v280 = vpack.c.b16 %v235, %v232
    %v281 = vpack.c.b16 %v236, %v233
    %v282 = vpack.c.b16 %v237, %v234
    %v283 = vpack.c.b16 %v241, %v238
    %v284 = vpack.c.b16 %v242, %v239
    %v285 = vpack.c.b16 %v243, %v240
    %v286 = vpack.c.b16 %v247, %v244
    %v287 = vpack.c.b16 %v248, %v245
    %v288 = vpack.c.b16 %v249, %v246
    %v289 = vpack.c.b16 %v253, %v250
    %v290 = vpack.c.b16 %v254, %v251
    %v291 = vpack.c.b16 %v255, %v252
    %v292 = vpack.c.b16 %v259, %v256
    %v293 = vpack.c.b16 %v260, %v257
    %v294 = vpack.c.b16 %v261, %v258
    %v295 = vpack.c.b16 %v265, %v262
    %v296 = vpack.c.b16 %v266, %v263
    %v297 = vpack.c.b16 %v267, %v264
    %v298 = vpack.c.b16 %v271, %v268
    %v299 = vpack.c.b16 %v272, %v269
    %v300 = vpack.c.b16 %v273, %v270
    %v301 = vpack.c.b16 %v277, %v274
    %v302 = vpack.c.b16 %v278, %v275
    %v303 = vpack.c.b16 %v279, %v276
    %328 = vmatprep.subr.bf16.mxu0 %v281
    %329 = vmatpush1.bf16.msra.mxu0 %v280
    %330 = vmatprep.subr.bf16.mxu0 %v284
    %331 = vmatpush1.bf16.msra.mxu0 %v283
    %332 = vmatprep.subr.bf16.mxu0 %v287
    %333 = vmatpush1.bf16.msra.mxu0 %v286
    %334 = vmatprep.subr.bf16.mxu0 %v290
    %335 = vmatpush1.bf16.msra.mxu0 %v289
    %336 = vmatprep.subr.bf16.mxu0 %v293
    %337 = vmatpush1.bf16.msra.mxu0 %v292
    %338 = vmatprep.subr.bf16.mxu0 %v296
    %339 = vmatpush1.bf16.msra.mxu0 %v295
    %340 = vmatprep.subr.bf16.mxu0 %v299
    %341 = vmatpush1.bf16.msra.mxu0 %v298
    %342 = vmatprep.subr.bf16.mxu0 %v302
    %343 = vmatpush1.bf16.msra.mxu0 %v301
    %344 = vmatprep.subr.bf16.mxu0 0
    %345 = vmatpush1.bf16.msra.mxu0 0
    %346 = vmatprep.subr.bf16.mxu0 0
    %347 = vmatpush1.bf16.msra.mxu0 0
    %348 = vmatprep.subr.bf16.mxu0 0
    %349 = vmatpush1.bf16.msra.mxu0 0
    %350 = vmatprep.subr.bf16.mxu0 0
    %351 = vmatpush1.bf16.msra.mxu0 0
    %352 = vmatprep.subr.bf16.mxu0 0
    %353 = vmatpush1.bf16.msra.mxu0 0
    %354 = vmatprep.subr.bf16.mxu0 0
    %355 = vmatpush1.bf16.msra.mxu0 0
    %356 = vmatprep.subr.bf16.mxu0 0
    %357 = vmatpush1.bf16.msra.mxu0 0
    %358 = vmatprep.subr.bf16.mxu0 0
    %359 = vmatpush1.bf16.msra.mxu0 0
    %360 = vmatprep.mubr.bf16.mxu0 0
    %361 = vmatmul.mubr.bf16.gmra.mrb[0].mxu0 %v160
    %v362 = vpop.f32.mrb[0].mxu0
    %v363 = vadd.f32 0.0, %v362
    %v364 = vpop.f32.mrb[0].mxu0
    %v365 = vadd.f32 0.0, %v364
    %v366 = vpop.f32.mrb[0].mxu0
    %v367 = vadd.f32 0.0, %v366
    %v368 = vpop.f32.mrb[0].mxu0
    %v369 = vadd.f32 0.0, %v368
    %370 = vmatprep.mubr.bf16.mxu0 0
    %371 = vmatmul.mubr.bf16.gmra.mrb[0].mxu0 %v161
    %v372 = vpop.f32.mrb[0].mxu0
    %v373 = vadd.f32 0.0, %v372
    %v374 = vpop.f32.mrb[0].mxu0
    %v375 = vadd.f32 0.0, %v374
    %v376 = vpop.f32.mrb[0].mxu0
    %v377 = vadd.f32 0.0, %v376
    %v378 = vpop.f32.mrb[0].mxu0
    %v379 = vadd.f32 0.0, %v378
    %380 = vmatprep.mubr.bf16.mxu0 0
    %381 = vmatmul.mubr.bf16.gmra.mrb[0].mxu0 %v162
    %v382 = vpop.f32.mrb[0].mxu0
    %v383 = vadd.f32 0.0, %v382
    %v384 = vpop.f32.mrb[0].mxu0
    %v385 = vadd.f32 0.0, %v384
    %v386 = vpop.f32.mrb[0].mxu0
    %v387 = vadd.f32 0.0, %v386
    %v388 = vpop.f32.mrb[0].mxu0
    %v389 = vadd.f32 0.0, %v388
    %390 = vmatprep.mubr.bf16.mxu0 0
    %391 = vmatmul.mubr.bf16.gmra.mrb[0].mxu0 %v163
    %v392 = vpop.f32.mrb[0].mxu0
    %v393 = vadd.f32 0.0, %v392
    %v394 = vpop.f32.mrb[0].mxu0
    %v395 = vadd.f32 0.0, %v394
    %v396 = vpop.f32.mrb[0].mxu0
    %v397 = vadd.f32 0.0, %v396
    %v398 = vpop.f32.mrb[0].mxu0
    %v399 = vadd.f32 0.0, %v398
    %400 = vmatprep.mubr.bf16.mxu0 0
    %401 = vmatmul.mubr.bf16.gmra.mrb[0].mxu0 %v164
    %v402 = vpop.f32.mrb[0].mxu0
    %v403 = vadd.f32 0.0, %v402
    %v404 = vpop.f32.mrb[0].mxu0
    %v405 = vadd.f32 0.0, %v404
    %v406 = vpop.f32.mrb[0].mxu0
    %v407 = vadd.f32 0.0, %v406
    %v408 = vpop.f32.mrb[0].mxu0
    %v409 = vadd.f32 0.0, %v408
    %410 = vmatprep.mubr.bf16.mxu0 0
    %411 = vmatmul.mubr.bf16.gmra.mrb[0].mxu0 %v165
    %v412 = vpop.f32.mrb[0].mxu0
    %v413 = vadd.f32 0.0, %v412
    %v414 = vpop.f32.mrb[0].mxu0
    %v415 = vadd.f32 0.0, %v414
    %v416 = vpop.f32.mrb[0].mxu0
    %v417 = vadd.f32 0.0, %v416
    %v418 = vpop.f32.mrb[0].mxu0
    %v419 = vadd.f32 0.0, %v418
    %420 = vmatprep.mubr.bf16.mxu0 0
    %421 = vmatmul.mubr.bf16.gmra.mrb[0].mxu0 %v166
    %v422 = vpop.f32.mrb[0].mxu0
    %v423 = vadd.f32 0.0, %v422
    %v424 = vpop.f32.mrb[0].mxu0
    %v425 = vadd.f32 0.0, %v424
    %v426 = vpop.f32.mrb[0].mxu0
    %v427 = vadd.f32 0.0, %v426
    %v428 = vpop.f32.mrb[0].mxu0
    %v429 = vadd.f32 0.0, %v428
    %430 = vmatprep.mubr.bf16.mxu0 0
    %431 = vmatmul.mubr.bf16.gmra.mrb[0].mxu0 %v167
    %v432 = vpop.f32.mrb[0].mxu0
    %v433 = vadd.f32 0.0, %v432
    %v434 = vpop.f32.mrb[0].mxu0
    %v435 = vadd.f32 0.0, %v434
    %v436 = vpop.f32.mrb[0].mxu0
    %v437 = vadd.f32 0.0, %v436
    %v438 = vpop.f32.mrb[0].mxu0
    %v439 = vadd.f32 0.0, %v438
    %440 = vdwg.mxu0
    %441 = vmatprep.subr.bf16.mxu0 0
    %442 = vmatpush1.bf16.msra.mxu0 %v282
    %443 = vmatprep.subr.bf16.mxu0 0
    %444 = vmatpush1.bf16.msra.mxu0 %v285
    %445 = vmatprep.subr.bf16.mxu0 0
    %446 = vmatpush1.bf16.msra.mxu0 %v288
    %447 = vmatprep.subr.bf16.mxu0 0
    %448 = vmatpush1.bf16.msra.mxu0 %v291
    %449 = vmatprep.subr.bf16.mxu0 0
    %450 = vmatpush1.bf16.msra.mxu0 %v294
    %451 = vmatprep.subr.bf16.mxu0 0
    %452 = vmatpush1.bf16.msra.mxu0 %v297
    %453 = vmatprep.subr.bf16.mxu0 0
    %454 = vmatpush1.bf16.msra.mxu0 %v300
    %455 = vmatprep.subr.bf16.mxu0 0
    %456 = vmatpush1.bf16.msra.mxu0 %v303
    %457 = vmatprep.subr.bf16.mxu0 0
    %458 = vmatpush1.bf16.msra.mxu0 0
    %459 = vmatprep.subr.bf16.mxu0 0
    %460 = vmatpush1.bf16.msra.mxu0 0
    %461 = vmatprep.subr.bf16.mxu0 0
    %462 = vmatpush1.bf16.msra.mxu0 0
    %463 = vmatprep.subr.bf16.mxu0 0
    %464 = vmatpush1.bf16.msra.mxu0 0
    %465 = vmatprep.subr.bf16.mxu0 0
    %466 = vmatpush1.bf16.msra.mxu0 0
    %467 = vmatprep.subr.bf16.mxu0 0
    %468 = vmatpush1.bf16.msra.mxu0 0
    %469 = vmatprep.subr.bf16.mxu0 0
    %470 = vmatpush1.bf16.msra.mxu0 0
    %471 = vmatprep.subr.bf16.mxu0 0
    %472 = vmatpush1.bf16.msra.mxu0 0
    %473 = vmatprep.mubr.bf16.mxu0 0
    %474 = vmatmul.mubr.bf16.gmra.mrb[0].mxu0 %v160
    %v475 = vpop.f32.mrb[0].mxu0
    %v476 = vadd.f32 0.0, %v475
    %v477 = vpop.f32.mrb[0].mxu0
    %v478 = vpop.f32.mrb[0].mxu0
    %v479 = vadd.f32 0.0, %v478
    %v480 = vpop.f32.mrb[0].mxu0
    %481 = vmatprep.mubr.bf16.mxu0 0
    %482 = vmatmul.mubr.bf16.gmra.mrb[0].mxu0 %v161
    %v483 = vpop.f32.mrb[0].mxu0
    %v484 = vadd.f32 0.0, %v483
    %v485 = vpop.f32.mrb[0].mxu0
    %v486 = vpop.f32.mrb[0].mxu0
    %v487 = vadd.f32 0.0, %v486
    %v488 = vpop.f32.mrb[0].mxu0
    %489 = vmatprep.mubr.bf16.mxu0 0
    %490 = vmatmul.mubr.bf16.gmra.mrb[0].mxu0 %v162
    %v491 = vpop.f32.mrb[0].mxu0
    %v492 = vadd.f32 0.0, %v491
    %v493 = vpop.f32.mrb[0].mxu0
    %v494 = vpop.f32.mrb[0].mxu0
    %v495 = vadd.f32 0.0, %v494
    %v496 = vpop.f32.mrb[0].mxu0
    %497 = vmatprep.mubr.bf16.mxu0 0
    %498 = vmatmul.mubr.bf16.gmra.mrb[0].mxu0 %v163
    %v499 = vpop.f32.mrb[0].mxu0
    %v500 = vadd.f32 0.0, %v499
    %v501 = vpop.f32.mrb[0].mxu0
    %v502 = vpop.f32.mrb[0].mxu0
    %v503 = vadd.f32 0.0, %v502
    %v504 = vpop.f32.mrb[0].mxu0
    %505 = vmatprep.mubr.bf16.mxu0 0
    %506 = vmatmul.mubr.bf16.gmra.mrb[0].mxu0 %v164
    %v507 = vpop.f32.mrb[0].mxu0
    %v508 = vadd.f32 0.0, %v507
    %v509 = vpop.f32.mrb[0].mxu0
    %v510 = vpop.f32.mrb[0].mxu0
    %v511 = vadd.f32 0.0, %v510
    %v512 = vpop.f32.mrb[0].mxu0
    %513 = vmatprep.mubr.bf16.mxu0 0
    %514 = vmatmul.mubr.bf16.gmra.mrb[0].mxu0 %v165
    %v515 = vpop.f32.mrb[0].mxu0
    %v516 = vadd.f32 0.0, %v515
    %v517 = vpop.f32.mrb[0].mxu0
    %v518 = vpop.f32.mrb[0].mxu0
    %v519 = vadd.f32 0.0, %v518
    %v520 = vpop.f32.mrb[0].mxu0
    %521 = vmatprep.mubr.bf16.mxu0 0
    %522 = vmatmul.mubr.bf16.gmra.mrb[0].mxu0 %v166
    %v523 = vpop.f32.mrb[0].mxu0
    %v524 = vadd.f32 0.0, %v523
    %v525 = vpop.f32.mrb[0].mxu0
    %v526 = vpop.f32.mrb[0].mxu0
    %v527 = vadd.f32 0.0, %v526
    %v528 = vpop.f32.mrb[0].mxu0
    %529 = vmatprep.mubr.bf16.mxu0 0
    %530 = vmatmul.mubr.bf16.gmra.mrb[0].mxu0 %v167
    %v531 = vpop.f32.mrb[0].mxu0
    %v532 = vadd.f32 0.0, %v531
    %v533 = vpop.f32.mrb[0].mxu0
    %v534 = vpop.f32.mrb[0].mxu0
    %v535 = vadd.f32 0.0, %v534
    %v536 = vpop.f32.mrb[0].mxu0
    %537 = vdwg.mxu0
    %v538 = vadd.f32 %v96, %v363
    %v539 = vadd.f32 %v97, %v365
    %v540 = vadd.f32 %v98, %v476
    %v541 = vadd.f32 %v99, %v367
    %v542 = vadd.f32 %v100, %v369
    %v543 = vadd.f32 %v101, %v479
    %v544 = vadd.f32 %v102, %v373
    %v545 = vadd.f32 %v103, %v375
    %v546 = vadd.f32 %v104, %v484
    %v547 = vadd.f32 %v105, %v377
    %v548 = vadd.f32 %v106, %v379
    %v549 = vadd.f32 %v107, %v487
    %v550 = vadd.f32 %v108, %v383
    %v551 = vadd.f32 %v109, %v385
    %v552 = vadd.f32 %v110, %v492
    %v553 = vadd.f32 %v111, %v387
    %v554 = vadd.f32 %v112, %v389
    %v555 = vadd.f32 %v113, %v495
    %v556 = vadd.f32 %v114, %v393
    %v557 = vadd.f32 %v115, %v395
    %v558 = vadd.f32 %v116, %v500
    %v559 = vadd.f32 %v117, %v397
    %v560 = vadd.f32 %v118, %v399
    %v561 = vadd.f32 %v119, %v503
    %v562 = vadd.f32 %v120, %v403
    %v563 = vadd.f32 %v121, %v405
    %v564 = vadd.f32 %v122, %v508
    %v565 = vadd.f32 %v123, %v407
    %v566 = vadd.f32 %v124, %v409
    %v567 = vadd.f32 %v125, %v511
    %v568 = vadd.f32 %v126, %v413
    %v569 = vadd.f32 %v127, %v415
    %v570 = vadd.f32 %v128, %v516
    %v571 = vadd.f32 %v129, %v417
    %v572 = vadd.f32 %v130, %v419
    %v573 = vadd.f32 %v131, %v519
    %v574 = vadd.f32 %v132, %v423
    %v575 = vadd.f32 %v133, %v425
    %v576 = vadd.f32 %v134, %v524
    %v577 = vadd.f32 %v135, %v427
    %v578 = vadd.f32 %v136, %v429
    %v579 = vadd.f32 %v137, %v527
    %v580 = vadd.f32 %v138, %v433
    %v581 = vadd.f32 %v139, %v435
    %v582 = vadd.f32 %v140, %v532
    %v583 = vadd.f32 %v141, %v437
    %v584 = vadd.f32 %v142, %v439
    %v585 = vadd.f32 %v143, %v535
    %586 = vst [vmem:[#allocation2] sm:$0xff] %v538
    %587 = vst [vmem:[#allocation2 + $0x8] sm:$0xff] %v539
    %588 = vst [vmem:[#allocation2 + $0x10] sm:$0xff] %v540
    %589 = vst [vmem:[#allocation2 + $0x18] sm:$0xff] %v541
    %590 = vst [vmem:[#allocation2 + $0x20] sm:$0xff] %v542
    %591 = vst [vmem:[#allocation2 + $0x28] sm:$0xff] %v543
    %592 = vst [vmem:[#allocation2 + $0x30] sm:$0xff] %v544
    %593 = vst [vmem:[#allocation2 + $0x38] sm:$0xff] %v545
    %594 = vst [vmem:[#allocation2 + $0x40] sm:$0xff] %v546
    %595 = vst [vmem:[#allocation2 + $0x48] sm:$0xff] %v547
    %596 = vst [vmem:[#allocation2 + $0x50] sm:$0xff] %v548
    %597 = vst [vmem:[#allocation2 + $0x58] sm:$0xff] %v549
    %598 = vst [vmem:[#allocation2 + $0x60] sm:$0xff] %v550
    %599 = vst [vmem:[#allocation2 + $0x68] sm:$0xff] %v551
    %600 = vst [vmem:[#allocation2 + $0x70] sm:$0xff] %v552
    %601 = vst [vmem:[#allocation2 + $0x78] sm:$0xff] %v553
    %602 = vst [vmem:[#allocation2 + $0x80] sm:$0xff] %v554
    %603 = vst [vmem:[#allocation2 + $0x88] sm:$0xff] %v555
    %604 = vst [vmem:[#allocation2 + $0x90] sm:$0xff] %v556
    %605 = vst [vmem:[#allocation2 + $0x98] sm:$0xff] %v557
    %606 = vst [vmem:[#allocation2 + $0xa0] sm:$0xff] %v558
    %607 = vst [vmem:[#allocation2 + $0xa8] sm:$0xff] %v559
    %608 = vst [vmem:[#allocation2 + $0xb0] sm:$0xff] %v560
    %609 = vst [vmem:[#allocation2 + $0xb8] sm:$0xff] %v561
    %610 = vst [vmem:[#allocation2 + $0xc0] sm:$0xff] %v562
    %611 = vst [vmem:[#allocation2 + $0xc8] sm:$0xff] %v563
    %612 = vst [vmem:[#allocation2 + $0xd0] sm:$0xff] %v564
    %613 = vst [vmem:[#allocation2 + $0xd8] sm:$0xff] %v565
    %614 = vst [vmem:[#allocation2 + $0xe0] sm:$0xff] %v566
    %615 = vst [vmem:[#allocation2 + $0xe8] sm:$0xff] %v567
    %616 = vst [vmem:[#allocation2 + $0xf0] sm:$0xff] %v568
    %617 = vst [vmem:[#allocation2 + $0xf8] sm:$0xff] %v569
    %618 = vst [vmem:[#allocation2 + $0x100] sm:$0xff] %v570
    %619 = vst [vmem:[#allocation2 + $0x108] sm:$0xff] %v571
    %620 = vst [vmem:[#allocation2 + $0x110] sm:$0xff] %v572
    %621 = vst [vmem:[#allocation2 + $0x118] sm:$0xff] %v573
    %622 = vst [vmem:[#allocation2 + $0x120] sm:$0xff] %v574
    %623 = vst [vmem:[#allocation2 + $0x128] sm:$0xff] %v575
    %624 = vst [vmem:[#allocation2 + $0x130] sm:$0xff] %v576
    %625 = vst [vmem:[#allocation2 + $0x138] sm:$0xff] %v577
    %626 = vst [vmem:[#allocation2 + $0x140] sm:$0xff] %v578
    %627 = vst [vmem:[#allocation2 + $0x148] sm:$0xff] %v579
    %628 = vst [vmem:[#allocation2 + $0x150] sm:$0xff] %v580
    %629 = vst [vmem:[#allocation2 + $0x158] sm:$0xff] %v581
    %630 = vst [vmem:[#allocation2 + $0x160] sm:$0xff] %v582
    %631 = vst [vmem:[#allocation2 + $0x168] sm:$0xff] %v583
    %632 = vst [vmem:[#allocation2 + $0x170] sm:$0xff] %v584
    %633 = vst [vmem:[#allocation2 + $0x178] sm:$0xff] %v585
    // Predicated region
    $region26: #{tpu_custom_call.1} parent=1 // pred_check
      %p634 = pneg %p44
    $region27: #{tpu_custom_call.1} parent=1 // pred_check_branch
      %636 = sbr.rel (%p634) target = $region29
    $region28: #{tpu_custom_call.1} parent=1 // pred_region
      %v637 = vld [vmem:[#allocation2] sm:$0xff]
      %v638 = vld [vmem:[#allocation2 + $0x8] sm:$0xff]
      %v639 = vld [vmem:[#allocation2 + $0x10] sm:$0xff]
      %v640 = vld [vmem:[#allocation2 + $0x18] sm:$0xff]
      %v641 = vld [vmem:[#allocation2 + $0x20] sm:$0xff]
      %v642 = vld [vmem:[#allocation2 + $0x28] sm:$0xff]
      %v643 = vld [vmem:[#allocation2 + $0x30] sm:$0xff]
      %v644 = vld [vmem:[#allocation2 + $0x38] sm:$0xff]
      %v645 = vld [vmem:[#allocation2 + $0x40] sm:$0xff]
      %v646 = vld [vmem:[#allocation2 + $0x48] sm:$0xff]
      %v647 = vld [vmem:[#allocation2 + $0x50] sm:$0xff]
      %v648 = vld [vmem:[#allocation2 + $0x58] sm:$0xff]
      %v649 = vld [vmem:[#allocation2 + $0x60] sm:$0xff]
      %v650 = vld [vmem:[#allocation2 + $0x68] sm:$0xff]
      %v651 = vld [vmem:[#allocation2 + $0x70] sm:$0xff]
      %v652 = vld [vmem:[#allocation2 + $0x78] sm:$0xff]
      %v653 = vld [vmem:[#allocation2 + $0x80] sm:$0xff]
      %v654 = vld [vmem:[#allocation2 + $0x88] sm:$0xff]
      %v655 = vld [vmem:[#allocation2 + $0x90] sm:$0xff]
      %v656 = vld [vmem:[#allocation2 + $0x98] sm:$0xff]
      %v657 = vld [vmem:[#allocation2 + $0xa0] sm:$0xff]
      %v658 = vld [vmem:[#allocation2 + $0xa8] sm:$0xff]
      %v659 = vld [vmem:[#allocation2 + $0xb0] sm:$0xff]
      %v660 = vld [vmem:[#allocation2 + $0xb8] sm:$0xff]
      %v661 = vld [vmem:[#allocation2 + $0xc0] sm:$0xff]
      %v662 = vld [vmem:[#allocation2 + $0xc8] sm:$0xff]
      %v663 = vld [vmem:[#allocation2 + $0xd0] sm:$0xff]
      %v664 = vld [vmem:[#allocation2 + $0xd8] sm:$0xff]
      %v665 = vld [vmem:[#allocation2 + $0xe0] sm:$0xff]
      %v666 = vld [vmem:[#allocation2 + $0xe8] sm:$0xff]
      %v667 = vld [vmem:[#allocation2 + $0xf0] sm:$0xff]
      %v668 = vld [vmem:[#allocation2 + $0xf8] sm:$0xff]
      %v669 = vld [vmem:[#allocation2 + $0x100] sm:$0xff]
      %v670 = vld [vmem:[#allocation2 + $0x108] sm:$0xff]
      %v671 = vld [vmem:[#allocation2 + $0x110] sm:$0xff]
      %v672 = vld [vmem:[#allocation2 + $0x118] sm:$0xff]
      %v673 = vld [vmem:[#allocation2 + $0x120] sm:$0xff]
      %v674 = vld [vmem:[#allocation2 + $0x128] sm:$0xff]
      %v675 = vld [vmem:[#allocation2 + $0x130] sm:$0xff]
      %v676 = vld [vmem:[#allocation2 + $0x138] sm:$0xff]
      %v677 = vld [vmem:[#allocation2 + $0x140] sm:$0xff]
      %v678 = vld [vmem:[#allocation2 + $0x148] sm:$0xff]
      %v679 = vld [vmem:[#allocation2 + $0x150] sm:$0xff]
      %v680 = vld [vmem:[#allocation2 + $0x158] sm:$0xff]
      %v681 = vld [vmem:[#allocation2 + $0x160] sm:$0xff]
      %v682 = vld [vmem:[#allocation2 + $0x168] sm:$0xff]
      %v683 = vld [vmem:[#allocation2 + $0x170] sm:$0xff]
      %v684 = vld [vmem:[#allocation2 + $0x178] sm:$0xff]
      %v685 = vld [vmem:[%s2] sm:$0x7]
      %v687 = vlaneseq
      %v688 = vshrl.u32 %v687, 7
      %v689 = vsub.s32 0, %v688
      %v690 = vrot.slane %v685, %v689
      %v691 = vlaneseq
      %v692 = vshrl.u32 %v691, 7
      %v693 = vsub.s32 1, %v692
      %v694 = vrot.slane %v685, %v693
      %v695 = vlaneseq
      %v696 = vshrl.u32 %v695, 7
      %v697 = vsub.s32 2, %v696
      %v698 = vrot.slane %v685, %v697
      %v702 = vadd.f32 %v637, %v690
      %v703 = vadd.f32 %v638, %v694
      %v704 = vadd.f32 %v639, %v698
      %v705 = vadd.f32 %v640, %v690
      %v706 = vadd.f32 %v641, %v694
      %v707 = vadd.f32 %v642, %v698
      %v708 = vadd.f32 %v643, %v690
      %v709 = vadd.f32 %v644, %v694
      %v710 = vadd.f32 %v645, %v698
      %v711 = vadd.f32 %v646, %v690
      %v712 = vadd.f32 %v647, %v694
      %v713 = vadd.f32 %v648, %v698
      %v714 = vadd.f32 %v649, %v690
      %v715 = vadd.f32 %v650, %v694
      %v716 = vadd.f32 %v651, %v698
      %v717 = vadd.f32 %v652, %v690
      %v718 = vadd.f32 %v653, %v694
      %v719 = vadd.f32 %v654, %v698
      %v720 = vadd.f32 %v655, %v690
      %v721 = vadd.f32 %v656, %v694
      %v722 = vadd.f32 %v657, %v698
      %v723 = vadd.f32 %v658, %v690
      %v724 = vadd.f32 %v659, %v694
      %v725 = vadd.f32 %v660, %v698
      %v726 = vadd.f32 %v661, %v690
      %v727 = vadd.f32 %v662, %v694
      %v728 = vadd.f32 %v663, %v698
      %v729 = vadd.f32 %v664, %v690
      %v730 = vadd.f32 %v665, %v694
      %v731 = vadd.f32 %v666, %v698
      %v732 = vadd.f32 %v667, %v690
      %v733 = vadd.f32 %v668, %v694
      %v734 = vadd.f32 %v669, %v698
      %v735 = vadd.f32 %v670, %v690
      %v736 = vadd.f32 %v671, %v694
      %v737 = vadd.f32 %v672, %v698
      %v738 = vadd.f32 %v673, %v690
      %v739 = vadd.f32 %v674, %v694
      %v740 = vadd.f32 %v675, %v698
      %v741 = vadd.f32 %v676, %v690
      %v742 = vadd.f32 %v677, %v694
      %v743 = vadd.f32 %v678, %v698
      %v744 = vadd.f32 %v679, %v690
      %v745 = vadd.f32 %v680, %v694
      %v746 = vadd.f32 %v681, %v698
      %v747 = vadd.f32 %v682, %v690
      %v748 = vadd.f32 %v683, %v694
      %v749 = vadd.f32 %v684, %v698
      %v750 = vpack.c.bf16 %v705, %v702
      %v751 = vpack.c.bf16 %v706, %v703
      %v752 = vpack.c.bf16 %v707, %v704
      %v753 = vpack.c.bf16 %v711, %v708
      %v754 = vpack.c.bf16 %v712, %v709
      %v755 = vpack.c.bf16 %v713, %v710
      %v756 = vpack.c.bf16 %v717, %v714
      %v757 = vpack.c.bf16 %v718, %v715
      %v758 = vpack.c.bf16 %v719, %v716
      %v759 = vpack.c.bf16 %v723, %v720
      %v760 = vpack.c.bf16 %v724, %v721
      %v761 = vpack.c.bf16 %v725, %v722
      %v762 = vpack.c.bf16 %v729, %v726
      %v763 = vpack.c.bf16 %v730, %v727
      %v764 = vpack.c.bf16 %v731, %v728
      %v765 = vpack.c.bf16 %v735, %v732
      %v766 = vpack.c.bf16 %v736, %v733
      %v767 = vpack.c.bf16 %v737, %v734
      %v768 = vpack.c.bf16 %v741, %v738
      %v769 = vpack.c.bf16 %v742, %v739
      %v770 = vpack.c.bf16 %v743, %v740
      %v771 = vpack.c.bf16 %v747, %v744
      %v772 = vpack.c.bf16 %v748, %v745
      %v773 = vpack.c.bf16 %v749, %v746
      %v798 = vunpack.c.l.b16 %v750
      %v799 = vunpack.c.l.b16 %v751
      %v800 = vunpack.c.l.b16 %v752
      %v801 = vunpack.c.h.b16 %v750
      %v802 = vunpack.c.h.b16 %v751
      %v803 = vunpack.c.h.b16 %v752
      %v804 = vunpack.c.l.b16 %v753
      %v805 = vunpack.c.l.b16 %v754
      %v806 = vunpack.c.l.b16 %v755
      %v807 = vunpack.c.h.b16 %v753
      %v808 = vunpack.c.h.b16 %v754
      %v809 = vunpack.c.h.b16 %v755
      %v810 = vunpack.c.l.b16 %v756
      %v811 = vunpack.c.l.b16 %v757
      %v812 = vunpack.c.l.b16 %v758
      %v813 = vunpack.c.h.b16 %v756
      %v814 = vunpack.c.h.b16 %v757
      %v815 = vunpack.c.h.b16 %v758
      %v816 = vunpack.c.l.b16 %v759
      %v817 = vunpack.c.l.b16 %v760
      %v818 = vunpack.c.l.b16 %v761
      %v819 = vunpack.c.h.b16 %v759
      %v820 = vunpack.c.h.b16 %v760
      %v821 = vunpack.c.h.b16 %v761
      %v822 = vunpack.c.l.b16 %v762
      %v823 = vunpack.c.l.b16 %v763
      %v824 = vunpack.c.l.b16 %v764
      %v825 = vunpack.c.h.b16 %v762
      %v826 = vunpack.c.h.b16 %v763
      %v827 = vunpack.c.h.b16 %v764
      %v828 = vunpack.c.l.b16 %v765
      %v829 = vunpack.c.l.b16 %v766
      %v830 = vunpack.c.l.b16 %v767
      %v831 = vunpack.c.h.b16 %v765
      %v832 = vunpack.c.h.b16 %v766
      %v833 = vunpack.c.h.b16 %v767
      %v834 = vunpack.c.l.b16 %v768
      %v835 = vunpack.c.l.b16 %v769
      %v836 = vunpack.c.l.b16 %v770
      %v837 = vunpack.c.h.b16 %v768
      %v838 = vunpack.c.h.b16 %v769
      %v839 = vunpack.c.h.b16 %v770
      %v840 = vunpack.c.l.b16 %v771
      %v841 = vunpack.c.l.b16 %v772
      %v842 = vunpack.c.l.b16 %v773
      %v843 = vunpack.c.h.b16 %v771
      %v844 = vunpack.c.h.b16 %v772
      %v845 = vunpack.c.h.b16 %v773
      %v846 = vpack.c.b16 %v799, %v798
      %v847 = vpack.c.b16 %v800, %v800
      %v848 = vpack.c.b16 %v802, %v801
      %v849 = vpack.c.b16 %v803, %v803
      %v850 = vpack.c.b16 %v805, %v804
      %v851 = vpack.c.b16 %v806, %v806
      %v852 = vpack.c.b16 %v808, %v807
      %v853 = vpack.c.b16 %v809, %v809
      %v854 = vpack.c.b16 %v811, %v810
      %v855 = vpack.c.b16 %v812, %v812
      %v856 = vpack.c.b16 %v814, %v813
      %v857 = vpack.c.b16 %v815, %v815
      %v858 = vpack.c.b16 %v817, %v816
      %v859 = vpack.c.b16 %v818, %v818
      %v860 = vpack.c.b16 %v820, %v819
      %v861 = vpack.c.b16 %v821, %v821
      %v862 = vpack.c.b16 %v823, %v822
      %v863 = vpack.c.b16 %v824, %v824
      %v864 = vpack.c.b16 %v826, %v825
      %v865 = vpack.c.b16 %v827, %v827
      %v866 = vpack.c.b16 %v829, %v828
      %v867 = vpack.c.b16 %v830, %v830
      %v868 = vpack.c.b16 %v832, %v831
      %v869 = vpack.c.b16 %v833, %v833
      %v870 = vpack.c.b16 %v835, %v834
      %v871 = vpack.c.b16 %v836, %v836
      %v872 = vpack.c.b16 %v838, %v837
      %v873 = vpack.c.b16 %v839, %v839
      %v874 = vpack.c.b16 %v841, %v840
      %v875 = vpack.c.b16 %v842, %v842
      %v876 = vpack.c.b16 %v844, %v843
      %v877 = vpack.c.b16 %v845, %v845
      %910 = vst [vmem:[#allocation8] sm:$0xff] %v846
      %911 = vst [vmem:[#allocation8 + $0x8] sm:$0xf] %v847
      %912 = vst [vmem:[#allocation8 + $0xc] sm:$0xff] %v848
      %913 = vst [vmem:[#allocation8 + $0x14] sm:$0xf] %v849
      %914 = vst [vmem:[#allocation8 + $0x18] sm:$0xff] %v850
      %915 = vst [vmem:[#allocation8 + $0x20] sm:$0xf] %v851
      %916 = vst [vmem:[#allocation8 + $0x24] sm:$0xff] %v852
      %917 = vst [vmem:[#allocation8 + $0x2c] sm:$0xf] %v853
      %918 = vst [vmem:[#allocation8 + $0x30] sm:$0xff] %v854
      %919 = vst [vmem:[#allocation8 + $0x38] sm:$0xf] %v855
      %920 = vst [vmem:[#allocation8 + $0x3c] sm:$0xff] %v856
      %921 = vst [vmem:[#allocation8 + $0x44] sm:$0xf] %v857
      %922 = vst [vmem:[#allocation8 + $0x48] sm:$0xff] %v858
      %923 = vst [vmem:[#allocation8 + $0x50] sm:$0xf] %v859
      %924 = vst [vmem:[#allocation8 + $0x54] sm:$0xff] %v860
      %925 = vst [vmem:[#allocation8 + $0x5c] sm:$0xf] %v861
      %926 = vst [vmem:[#allocation8 + $0x60] sm:$0xff] %v862
      %927 = vst [vmem:[#allocation8 + $0x68] sm:$0xf] %v863
      %928 = vst [vmem:[#allocation8 + $0x6c] sm:$0xff] %v864
      %929 = vst [vmem:[#allocation8 + $0x74] sm:$0xf] %v865
      %930 = vst [vmem:[#allocation8 + $0x78] sm:$0xff] %v866
      %931 = vst [vmem:[#allocation8 + $0x80] sm:$0xf] %v867
      %932 = vst [vmem:[#allocation8 + $0x84] sm:$0xff] %v868
      %933 = vst [vmem:[#allocation8 + $0x8c] sm:$0xf] %v869
      %934 = vst [vmem:[#allocation8 + $0x90] sm:$0xff] %v870
      %935 = vst [vmem:[#allocation8 + $0x98] sm:$0xf] %v871
      %936 = vst [vmem:[#allocation8 + $0x9c] sm:$0xff] %v872
      %937 = vst [vmem:[#allocation8 + $0xa4] sm:$0xf] %v873
      %938 = vst [vmem:[#allocation8 + $0xa8] sm:$0xff] %v874
      %939 = vst [vmem:[#allocation8 + $0xb0] sm:$0xf] %v875
      %940 = vst [vmem:[#allocation8 + $0xb4] sm:$0xff] %v876
      %941 = vst [vmem:[#allocation8 + $0xbc] sm:$0xf] %v877
    $region29: #{tpu_custom_call.1} parent=1 // pred_fallthru
      _
    // Predicated region
    $region30: #{tpu_custom_call.1} parent=1 // pred_check
      _
    $region31: #{tpu_custom_call.1} parent=1 // pred_check_branch
      %943 = sbr.rel (0) target = $region33
    $region32: #{tpu_custom_call.1} parent=1 // pred_region
      %s945 = ssub.s32 3072, 3072
      %946 = vsyncadd [#allocation5], %s945
      %s947 = sshll.u32 [#allocation8], 4
      %s948 = int_to_ptr.vmem [resolvable:$true] %s947
      %953 = dma.vmem_to_hbm [thread:$0]  %s948, 3072, %s3, [#allocation5], 192, 192, 12
    $region33: #{tpu_custom_call.1} parent=1 // pred_fallthru
      _
    // Predicated region
    $region34: #{tpu_custom_call.1} parent=1 // pred_check
      _
    $region35: #{tpu_custom_call.1} parent=1 // pred_check_branch
      %955 = sbr.rel (0) target = $region37
    $region36: #{tpu_custom_call.1} parent=1 // pred_region
      %956 = dma.done [#allocation5], 3072
    $region37: #{tpu_custom_call.1} parent=1 // pred_fallthru
      _
    %957 = vsyncpa [#allocation4], 1
    %958 = vsyncpa [#allocation7], 1
    %959 = vsyncpa [#allocation5], 1

</llo_original>
